<compile_context>
chip_gen: v7x
topology: tpu7x:2x2x1
jax: 0.10.0
libtpu: 0.0.40
codegen_flags: <defaults>
</compile_context>

<pallas_src>
import math

import jax
import jax.numpy as jnp
from jax.experimental import pallas as pl
from jax.experimental.pallas import tpu as pltpu

B = 4                          # example batch
H = 40                         # input height (W = 1, C_in = 1); 32 * (40//2) * 1 == 640
CONV_C = 32                    # conv1 output channels
POOL_H = H // 2                # 20  (MaxPool2d((2,1), stride=2))
RNN_IN = CONV_C * POOL_H * 1   # 640, matches nn.RNN(32*20*1, 64)
RNN_H = 64
FC1 = 128
NCLS = 2
NCLS_PAD = 128                 # fc2 output lanes padded to a full vreg lane width
BLOCK_B = 256                  # activation rows per grid step (MXU M on v6e/v7x)


def _round_up(n, m):
    return ((n + m - 1) // m) * m


# ----------------------------- fused kernel ---------------------------------
def _cnn_rnn_kernel(x_ref, mcat_ref, bc_ref, wih_ref, brnn_ref,
                    w1_ref, b1_ref, w2_ref, b2_ref, out_ref):
    """conv(3x1,pad 1)+ReLU+maxpool(2x1) -> 1-step tanh RNN -> fc1+ReLU -> fc2.

    x:    (BB, 40)    raw input rows (channel/W dims squeezed), f32.
    mcat: (40, 1280)  [even | odd] conv shift matrices, bf16; col = p*32 + c.
    bc:   (1, 640)    conv bias tiled over pooled positions, f32.
    wih:  (640, 64)   RNN input weights (rows permuted to h-major/c-minor), bf16.
    brnn: (1, 64)     b_ih + b_hh, f32.
    w1/b1, w2/b2:     fc1 / fc2 (weights pre-transposed to (in, out), bf16;
                      fc2 padded to 128 output lanes).
    """
    x = x_ref[...].astype(jnp.bfloat16)                                # (BB, 40)
    # Conv for even & odd rows in ONE MXU pass: (BB, 40) @ (40, 1280) -> f32.
    y = jnp.dot(x, mcat_ref[...], preferred_element_type=jnp.float32)
    # relu(max(even, odd) + bias) == maxpool(relu(conv + bias)); (BB, 640) lane-dense.
    pooled = jnp.maximum(
        jnp.maximum(y[:, :RNN_IN], y[:, RNN_IN:]) + bc_ref[...], 0.0)
    # Single-step tanh RNN (seq_len == 1, h0 == 0, so the W_hh term is zero).
    h = jnp.tanh(jnp.dot(pooled.astype(jnp.bfloat16), wih_ref[...],
                         preferred_element_type=jnp.float32) + brnn_ref[...])
    h1 = jnp.maximum(jnp.dot(h.astype(jnp.bfloat16), w1_ref[...],
                             preferred_element_type=jnp.float32) + b1_ref[...], 0.0)
    out_ref[...] = (jnp.dot(h1.astype(jnp.bfloat16), w2_ref[...],
                            preferred_element_type=jnp.float32) + b2_ref[...])


def _resident(shape):
    """Whole array as one block; same block every grid step -> stays VMEM-resident."""
    return pl.BlockSpec(shape, lambda i, _n=len(shape): (0,) * _n)


# --------------------------- one-time param prep -----------------------------
def _conv_shift_matrix(wc, parity):
    """M (H, POOL_H*CONV_C): (x @ M)[b, p*32+c] == conv row (2p+parity), channel c."""
    i = jnp.arange(H)[:, None, None]                  # input row
    p = jnp.arange(POOL_H)[None, :, None]             # pooled output row
    k = jnp.arange(3)[None, None, :]                  # conv tap
    sel = (i == 2 * p + parity + k - 1).astype(jnp.float32)   # pad=(1,0) via no-match
    return jnp.einsum('hpk,kc->hpc', sel, wc).reshape(H, POOL_H * CONV_C)


def prepare_params(params):
    """Fold layout permutations / transposes / bias sums / dtype casts into weights once."""
    conv_w, conv_b, w_ih, b_ih, b_hh, w1, b1, w2, b2 = params
    wc = conv_w.reshape(CONV_C, 3).T                                   # (3, 32): wc[k, c]
    me = _conv_shift_matrix(wc, parity=0)                              # (40, 640)
    mo = _conv_shift_matrix(wc, parity=1)                              # (40, 640)
    mcat = jnp.concatenate([me, mo], axis=1).astype(jnp.bfloat16)      # (40, 1280)
    bc = jnp.tile(conv_b, POOL_H).reshape(1, RNN_IN)                   # (1, 640) f32
    # flat[b, c*20+h]  ->  pooled_flat[b, h*32+c]: permute w_ih's K axis to match.
    wih = jnp.transpose(w_ih.reshape(RNN_H, CONV_C, POOL_H), (2, 1, 0))
    wih = wih.reshape(RNN_IN, RNN_H).astype(jnp.bfloat16)              # (640, 64)
    brnn = (b_ih + b_hh).reshape(1, RNN_H)                             # (1, 64) f32
    w1t = w1.T.astype(jnp.bfloat16)                                    # (64, 128)
    b1r = b1.reshape(1, FC1)                                           # (1, 128) f32
    w2t = jnp.pad(w2.T, ((0, 0), (0, NCLS_PAD - NCLS))).astype(jnp.bfloat16)  # (128, 128)
    b2r = jnp.pad(b2, (0, NCLS_PAD - NCLS)).reshape(1, NCLS_PAD)       # (1, 128) f32
    return (mcat, bc, wih, brnn, w1t, b1r, w2t, b2r)


# ------------------------------ forward pass ---------------------------------
def cnn_rnn_forward(x, prepped, *, block_b=BLOCK_B):
    """x: NCHW float32 (B, 1, 40, 1)  ->  logits (B, 2)."""
    mcat, bc, wih, brnn, w1t, b1, w2t, b2 = prepped
    bx = x.shape[0]
    x2 = x.reshape(bx, H)                                  # squeeze C=1, W=1

    bb = min(block_b, _round_up(bx, 8))                    # rows per grid step (mult. of 8)
    bp = _round_up(bx, bb)                                 # padded batch
    if bp != bx:
        x2 = jnp.pad(x2, ((0, bp - bx), (0, 0)))
    grid = (bp // bb,)

    flops = 2 * bp * (H * 2 * RNN_IN + RNN_IN * RNN_H + RNN_H * FC1 + FC1 * NCLS_PAD)
    weight_bytes = (mcat.size * 2 + bc.size * 4 + wih.size * 2 + brnn.size * 4
                    + w1t.size * 2 + b1.size * 4 + w2t.size * 2 + b2.size * 4)
    bytes_accessed = x2.size * 4 + weight_bytes + bp * NCLS_PAD * 4

    out = pl.pallas_call(
        _cnn_rnn_kernel,
        grid=grid,
        in_specs=[pl.BlockSpec((bb, H), lambda i: (i, 0)),       # activations: per-step block
                  _resident(mcat.shape), _resident(bc.shape),    # weights: VMEM-resident
                  _resident(wih.shape), _resident(brnn.shape),
                  _resident(w1t.shape), _resident(b1.shape),
                  _resident(w2t.shape), _resident(b2.shape)],
        out_specs=pl.BlockSpec((bb, NCLS_PAD), lambda i: (i, 0)),
        out_shape=jax.ShapeDtypeStruct((bp, NCLS_PAD), jnp.float32),
        compiler_params=pltpu.CompilerParams(dimension_semantics=("parallel",)),
        cost_estimate=pl.CostEstimate(flops=flops,
                                      transcendentals=bp * RNN_H,
                                      bytes_accessed=bytes_accessed),
    )(x2, mcat, bc, wih, brnn, w1t, b1, w2t, b2)
    return out[:bx, :NCLS]


# ------------------------------- reference -----------------------------------
def reference_forward(x, params):
    """Pure-JAX f32 reference matching the PyTorch module exactly."""
    conv_w, conv_b, w_ih, b_ih, b_hh, w1, b1, w2, b2 = params
    bx = x.shape[0]
    x2 = x[:, 0, :, 0]                                              # (B, H)
    xp = jnp.pad(x2, ((0, 0), (1, 1)))                              # pad=(1,0) along H
    patches = jnp.stack([xp[:, 0:H], xp[:, 1:H + 1], xp[:, 2:H + 2]], axis=-1)  # (B,H,3)
    conv = jnp.einsum('bhk,ck->bch', patches, conv_w.reshape(CONV_C, 3)) \
        + conv_b[None, :, None]
    conv = jnp.maximum(conv, 0.0)
    pooled = jnp.max(conv.reshape(bx, CONV_C, POOL_H, 2), axis=-1)  # (B, C, 20)
    flat = pooled.reshape(bx, RNN_IN)                               # NCHW flatten: c*20+h
    h = jnp.tanh(flat @ w_ih.T + b_ih + b_hh)                       # h0 == 0, seq_len == 1
    h1 = jnp.maximum(h @ w1.T + b1, 0.0)
    return h1 @ w2.T + b2


def init_params(key):
    """Deterministic PyTorch-style uniform(+-1/sqrt(fan)) init; same shapes as __init__."""
    ks = jax.random.split(key, 9)

    def u(k, shape, fan):
        bound = 1.0 / math.sqrt(fan)
        return jax.random.uniform(k, shape, jnp.float32, -bound, bound)

    conv_w = u(ks[0], (CONV_C, 1, 3, 1), 1 * 3 * 1)     # Conv2d(1, 32, (3,1))
    conv_b = u(ks[1], (CONV_C,), 1 * 3 * 1)
    w_ih = u(ks[2], (RNN_H, RNN_IN), RNN_H)             # nn.RNN(640, 64)
    b_ih = u(ks[3], (RNN_H,), RNN_H)
    b_hh = u(ks[4], (RNN_H,), RNN_H)                    # (W_hh unused: h0 == 0, seq_len == 1)
    w1 = u(ks[5], (FC1, RNN_H), RNN_H)                  # Linear(64, 128)
    b1 = u(ks[6], (FC1,), RNN_H)
    w2 = u(ks[7], (NCLS, FC1), FC1)                     # Linear(128, 2)
    b2 = u(ks[8], (NCLS,), FC1)
    return (conv_w, conv_b, w_ih, b_ih, b_hh, w1, b1, w2, b2)


if __name__ == "__main__":
    key = jax.random.PRNGKey(0)
    kp, kx = jax.random.split(key)
    params = init_params(kp)
    prepped = prepare_params(params)                     # one-time weight prep
    fwd = jax.jit(lambda xx: cnn_rnn_forward(xx, prepped))

    ok = True
    # Small batch (original spec size) + a batch that exercises padding and
    # multiple grid steps with weights held VMEM-resident across steps.
    for bx in (B, 300):
        xk = jax.random.fold_in(kx, bx)
        x = jax.random.normal(xk, (bx, 1, H, 1), jnp.float32)   # NCHW, 32*20*1 == 640
        out = fwd(x)
        jax.block_until_ready(out)
        assert out.shape == (bx, NCLS) and out.dtype == jnp.float32
        assert bool(jnp.all(jnp.isfinite(out)))
        ref = reference_forward(x, params)
        # bf16 MXU operands with f32 accumulation: observed error << 2e-2 budget.
        ok &= bool(jnp.allclose(out, ref, atol=2e-2, rtol=2e-2))
    assert ok, "mismatch vs reference"
    print("KERNEL_OK")
</pallas_src>

<mosaic_0001>
module attributes {stable_mosaic.version = 11 : i64} {
  func.func @_cnn_rnn_kernel(%arg0: i32, %arg1: memref<8x40xf32, #tpu.memory_space<vmem>>, %arg2: memref<40x1280xbf16, #tpu.memory_space<vmem>>, %arg3: memref<1x640xf32, #tpu.memory_space<vmem>>, %arg4: memref<640x64xbf16, #tpu.memory_space<vmem>>, %arg5: memref<1x64xf32, #tpu.memory_space<vmem>>, %arg6: memref<64x128xbf16, #tpu.memory_space<vmem>>, %arg7: memref<1x128xf32, #tpu.memory_space<vmem>>, %arg8: memref<128x128xbf16, #tpu.memory_space<vmem>>, %arg9: memref<1x128xf32, #tpu.memory_space<vmem>>, %arg10: memref<8x128xf32, #tpu.memory_space<vmem>>) attributes {dimension_semantics = [#tpu.dimension_semantics<parallel>], iteration_bounds = array<i64: 1>, scalar_prefetch = 0 : i64, scratch_operands = 0 : i64, tpu.core_type = #tpu.core_type<tc>, window_params = [{transform_indices = @transform_0, window_bounds = array<i64: 8, 40>}, {pipeline_mode = #tpu.pipeline_mode<synchronous>, transform_indices = @transform_1, window_bounds = array<i64: 40, 1280>}, {pipeline_mode = #tpu.pipeline_mode<synchronous>, transform_indices = @transform_2, window_bounds = array<i64: 1, 640>}, {pipeline_mode = #tpu.pipeline_mode<synchronous>, transform_indices = @transform_3, window_bounds = array<i64: 640, 64>}, {pipeline_mode = #tpu.pipeline_mode<synchronous>, transform_indices = @transform_4, window_bounds = array<i64: 1, 64>}, {pipeline_mode = #tpu.pipeline_mode<synchronous>, transform_indices = @transform_5, window_bounds = array<i64: 64, 128>}, {pipeline_mode = #tpu.pipeline_mode<synchronous>, transform_indices = @transform_6, window_bounds = array<i64: 1, 128>}, {pipeline_mode = #tpu.pipeline_mode<synchronous>, transform_indices = @transform_7, window_bounds = array<i64: 128, 128>}, {pipeline_mode = #tpu.pipeline_mode<synchronous>, transform_indices = @transform_8, window_bounds = array<i64: 1, 128>}, {transform_indices = @transform_9, window_bounds = array<i64: 8, 128>}]} {
    %c0 = arith.constant 0 : index
    %c0_0 = arith.constant 0 : index
    %0 = vector.load %arg1[%c0, %c0_0] : memref<8x40xf32, #tpu.memory_space<vmem>>, vector<8x40xf32>
    %1 = arith.truncf %0 : vector<8x40xf32> to vector<8x40xbf16>
    %c0_1 = arith.constant 0 : index
    %c0_2 = arith.constant 0 : index
    %2 = vector.load %arg2[%c0_1, %c0_2] : memref<40x1280xbf16, #tpu.memory_space<vmem>>, vector<40x1280xbf16>
    %cst = arith.constant dense<0.000000e+00> : vector<8x1280xf32>
    %3 = tpu.matmul %1, %2, %cst {dimension_numbers = #tpu.dot_dimension_numbers<[1], [0], [0], [1], [0, 0, 1, 1], [], []>} : vector<8x40xbf16>, vector<40x1280xbf16>, vector<8x1280xf32> -> vector<8x1280xf32>
    %4 = vector.extract_strided_slice %3 {offsets = [0, 0], sizes = [8, 640], strides = [1, 1]} : vector<8x1280xf32> to vector<8x640xf32>
    %5 = vector.extract_strided_slice %3 {offsets = [0, 640], sizes = [8, 640], strides = [1, 1]} : vector<8x1280xf32> to vector<8x640xf32>
    %6 = arith.maximumf %4, %5 : vector<8x640xf32>
    %c0_3 = arith.constant 0 : index
    %c0_4 = arith.constant 0 : index
    %7 = vector.load %arg3[%c0_3, %c0_4] : memref<1x640xf32, #tpu.memory_space<vmem>>, vector<1x640xf32>
    %8 = vector.broadcast %7 : vector<1x640xf32> to vector<8x640xf32>
    %9 = arith.addf %6, %8 : vector<8x640xf32>
    %cst_5 = arith.constant 0.000000e+00 : f32
    %10 = vector.broadcast %cst_5 : f32 to vector<8x640xf32>
    %11 = arith.maximumf %9, %10 : vector<8x640xf32>
    %12 = arith.truncf %11 : vector<8x640xf32> to vector<8x640xbf16>
    %c0_6 = arith.constant 0 : index
    %c0_7 = arith.constant 0 : index
    %13 = vector.load %arg4[%c0_6, %c0_7] : memref<640x64xbf16, #tpu.memory_space<vmem>>, vector<640x64xbf16>
    %cst_8 = arith.constant dense<0.000000e+00> : vector<8x64xf32>
    %14 = tpu.matmul %12, %13, %cst_8 {dimension_numbers = #tpu.dot_dimension_numbers<[1], [0], [0], [1], [0, 0, 1, 1], [], []>} : vector<8x640xbf16>, vector<640x64xbf16>, vector<8x64xf32> -> vector<8x64xf32>
    %c0_9 = arith.constant 0 : index
    %c0_10 = arith.constant 0 : index
    %15 = vector.load %arg5[%c0_9, %c0_10] : memref<1x64xf32, #tpu.memory_space<vmem>>, vector<1x64xf32>
    %16 = vector.broadcast %15 : vector<1x64xf32> to vector<8x64xf32>
    %17 = arith.addf %14, %16 : vector<8x64xf32>
    %18 = math.tanh %17 : vector<8x64xf32>
    %19 = arith.truncf %18 : vector<8x64xf32> to vector<8x64xbf16>
    %c0_11 = arith.constant 0 : index
    %c0_12 = arith.constant 0 : index
    %20 = vector.load %arg6[%c0_11, %c0_12] : memref<64x128xbf16, #tpu.memory_space<vmem>>, vector<64x128xbf16>
    %cst_13 = arith.constant dense<0.000000e+00> : vector<8x128xf32>
    %21 = tpu.matmul %19, %20, %cst_13 {dimension_numbers = #tpu.dot_dimension_numbers<[1], [0], [0], [1], [0, 0, 1, 1], [], []>} : vector<8x64xbf16>, vector<64x128xbf16>, vector<8x128xf32> -> vector<8x128xf32>
    %c0_14 = arith.constant 0 : index
    %c0_15 = arith.constant 0 : index
    %22 = vector.load %arg7[%c0_14, %c0_15] : memref<1x128xf32, #tpu.memory_space<vmem>>, vector<1x128xf32>
    %23 = vector.broadcast %22 : vector<1x128xf32> to vector<8x128xf32>
    %24 = arith.addf %21, %23 : vector<8x128xf32>
    %cst_16 = arith.constant 0.000000e+00 : f32
    %25 = vector.broadcast %cst_16 : f32 to vector<8x128xf32>
    %26 = arith.maximumf %24, %25 : vector<8x128xf32>
    %27 = arith.truncf %26 : vector<8x128xf32> to vector<8x128xbf16>
    %c0_17 = arith.constant 0 : index
    %c0_18 = arith.constant 0 : index
    %28 = vector.load %arg8[%c0_17, %c0_18] : memref<128x128xbf16, #tpu.memory_space<vmem>>, vector<128x128xbf16>
    %cst_19 = arith.constant dense<0.000000e+00> : vector<8x128xf32>
    %29 = tpu.matmul %27, %28, %cst_19 {dimension_numbers = #tpu.dot_dimension_numbers<[1], [0], [0], [1], [0, 0, 1, 1], [], []>} : vector<8x128xbf16>, vector<128x128xbf16>, vector<8x128xf32> -> vector<8x128xf32>
    %c0_20 = arith.constant 0 : index
    %c0_21 = arith.constant 0 : index
    %30 = vector.load %arg9[%c0_20, %c0_21] : memref<1x128xf32, #tpu.memory_space<vmem>>, vector<1x128xf32>
    %31 = vector.broadcast %30 : vector<1x128xf32> to vector<8x128xf32>
    %32 = arith.addf %29, %31 : vector<8x128xf32>
    %c0_22 = arith.constant 0 : index
    %c0_23 = arith.constant 0 : index
    %33 = vector.load %arg10[%c0_22, %c0_23] : memref<8x128xf32, #tpu.memory_space<vmem>>, vector<8x128xf32>
    tpu.vector_store %arg10[%c0_22, %c0_23], %32 {strides = array<i32>} : memref<8x128xf32, #tpu.memory_space<vmem>>, vector<8x128xf32>,
    return
  }
  func.func @transform_0(%arg0: i32) -> (i32, i32) {
    %c0_i32 = arith.constant 0 : i32
    %c0_i32_0 = arith.constant 0 : i32
    return %arg0, %c0_i32 : i32, i32
  }
  func.func @transform_1(%arg0: i32) -> (i32, i32) {
    %c0_i32 = arith.constant 0 : i32
    %c0_i32_0 = arith.constant 0 : i32
    %c0_i32_1 = arith.constant 0 : i32
    return %c0_i32, %c0_i32_0 : i32, i32
  }
  func.func @transform_2(%arg0: i32) -> (i32, i32) {
    %c0_i32 = arith.constant 0 : i32
    %c0_i32_0 = arith.constant 0 : i32
    %c0_i32_1 = arith.constant 0 : i32
    return %c0_i32, %c0_i32_0 : i32, i32
  }
  func.func @transform_3(%arg0: i32) -> (i32, i32) {
    %c0_i32 = arith.constant 0 : i32
    %c0_i32_0 = arith.constant 0 : i32
    %c0_i32_1 = arith.constant 0 : i32
    return %c0_i32, %c0_i32_0 : i32, i32
  }
  func.func @transform_4(%arg0: i32) -> (i32, i32) {
    %c0_i32 = arith.constant 0 : i32
    %c0_i32_0 = arith.constant 0 : i32
    %c0_i32_1 = arith.constant 0 : i32
    return %c0_i32, %c0_i32_0 : i32, i32
  }
  func.func @transform_5(%arg0: i32) -> (i32, i32) {
    %c0_i32 = arith.constant 0 : i32
    %c0_i32_0 = arith.constant 0 : i32
    %c0_i32_1 = arith.constant 0 : i32
    return %c0_i32, %c0_i32_0 : i32, i32
  }
  func.func @transform_6(%arg0: i32) -> (i32, i32) {
    %c0_i32 = arith.constant 0 : i32
    %c0_i32_0 = arith.constant 0 : i32
    %c0_i32_1 = arith.constant 0 : i32
    return %c0_i32, %c0_i32_0 : i32, i32
  }
  func.func @transform_7(%arg0: i32) -> (i32, i32) {
    %c0_i32 = arith.constant 0 : i32
    %c0_i32_0 = arith.constant 0 : i32
    %c0_i32_1 = arith.constant 0 : i32
    return %c0_i32, %c0_i32_0 : i32, i32
  }
  func.func @transform_8(%arg0: i32) -> (i32, i32) {
    %c0_i32 = arith.constant 0 : i32
    %c0_i32_0 = arith.constant 0 : i32
    %c0_i32_1 = arith.constant 0 : i32
    return %c0_i32, %c0_i32_0 : i32, i32
  }
  func.func @transform_9(%arg0: i32) -> (i32, i32) {
    %c0_i32 = arith.constant 0 : i32
    %c0_i32_0 = arith.constant 0 : i32
    return %arg0, %c0_i32 : i32, i32
  }
}

</mosaic_0001>

<llo_original>
// kernel: _lambda_.1
$region0: #{_lambda_.1}
  #allocation0 [shape = 'u32[]', space=smem, size = 0x4, offset = 0x4, fixed_abs, tag = 'smem constant byte address 0x4 - core index']
  #allocation1 [shape = 'u32[144,128]{1,0:T(1,128)}', space=vmem, size = 0x12000, scoped, tag = 'internal scratch']
  %s0 = inlined_call_operand.vmem [shape: f32[8,40], index: 0, kind: input, shape index: {}]
  %s1 = inlined_call_operand.hbm [shape: bf16[40,1280], index: 1, kind: input, shape index: {}]
  %s2 = inlined_call_operand.vmem [shape: f32[1,640], index: 2, kind: input, shape index: {}]
  %s3 = inlined_call_operand.hbm [shape: bf16[640,64], index: 3, kind: input, shape index: {}]
  %s4 = inlined_call_operand.vmem [shape: f32[1,64], index: 4, kind: input, shape index: {}]
  %s5 = inlined_call_operand.vmem [shape: bf16[64,128], index: 5, kind: input, shape index: {}]
  %s6 = inlined_call_operand.vmem [shape: f32[1,128], index: 6, kind: input, shape index: {}]
  %s7 = inlined_call_operand.hbm [shape: bf16[128,128], index: 7, kind: input, shape index: {}]
  %s8 = inlined_call_operand.vmem [shape: f32[1,128], index: 8, kind: input, shape index: {}]
  %s9 = inlined_call_operand.vmem [shape: f32[8,128], index: 9, kind: output, shape index: {}]
  %s10 = sld [smem:[#allocation0]]
  $region58: #{_lambda_.1} parent=0
    _
  %s12 = ssub.s32 1, %s10
  %s13 = scalar_select 0, %s12, %s10
  $region1: #{_lambda_.1} parent=0
    #allocation2 [shape = 'u8[102400]{0}', space=vmem, size = 0x19000, scoped, tag = 'input window, operand 1, single buffered']
    #allocation3 [shape = 's32[1]{0}', space=sflag, size = 0x4, scoped, tag = 'scoped memory for _lambda_.1']
    #allocation4 [shape = 'u8[163840]{0}', space=vmem, size = 0x28000, scoped, tag = 'input window, operand 3, single buffered']
    #allocation5 [shape = 's32[1]{0}', space=sflag, size = 0x4, scoped, tag = 'scoped memory for _lambda_.1']
    #allocation6 [shape = 'u8[32768]{0}', space=vmem, size = 0x8000, scoped, tag = 'input window, operand 7, single buffered']
    %14 = vsyncpa [#allocation3], 0
    %15 = vsyncpa [#allocation5], 0
    // Predicated region
    $region2: #{_lambda_.1} parent=1 // pred_check
      _
    $region3: #{_lambda_.1} parent=1 // pred_check_branch
      %17 = sbr.rel (0) target = $region5
    $region4: #{_lambda_.1} parent=1 // pred_region
      _
    $region5: #{_lambda_.1} parent=1 // pred_fallthru
      _
    // Predicated region
    $region6: #{_lambda_.1} parent=1 // pred_check
      _
    $region7: #{_lambda_.1} parent=1 // pred_check_branch
      %19 = sbr.rel (0) target = $region9
    $region8: #{_lambda_.1} parent=1 // pred_region
      %s21 = ssub.s32 3200, 3200
      %22 = vsyncadd [#allocation3], %s21
      %s23 = sshll.u32 [#allocation2], 4
      %s24 = int_to_ptr.vmem [resolvable:$true] %s23
      %29 = dma.hbm_to_vmem [thread:$0]  %s1, 3200, %s24, [#allocation3], 640, 640, 40
    $region9: #{_lambda_.1} parent=1 // pred_fallthru
      _
    // Predicated region
    $region10: #{_lambda_.1} parent=1 // pred_check
      _
    $region11: #{_lambda_.1} parent=1 // pred_check_branch
      %31 = sbr.rel (0) target = $region13
    $region12: #{_lambda_.1} parent=1 // pred_region
      _
    $region13: #{_lambda_.1} parent=1 // pred_fallthru
      _
    // Predicated region
    $region14: #{_lambda_.1} parent=1 // pred_check
      _
    $region15: #{_lambda_.1} parent=1 // pred_check_branch
      %33 = sbr.rel (0) target = $region17
    $region16: #{_lambda_.1} parent=1 // pred_region
      %s35 = ssub.s32 5120, 5120
      %36 = vsyncadd [#allocation5], %s35
      %s37 = sshll.u32 [#allocation4], 4
      %s38 = int_to_ptr.vmem [resolvable:$true] %s37
      %43 = dma.hbm_to_vmem [thread:$0]  %s3, 5120, %s38, [#allocation5], 64, 64, 4
    $region17: #{_lambda_.1} parent=1 // pred_fallthru
      _
    // Predicated region
    $region18: #{_lambda_.1} parent=1 // pred_check
      _
    $region19: #{_lambda_.1} parent=1 // pred_check_branch
      %45 = sbr.rel (0) target = $region21
    $region20: #{_lambda_.1} parent=1 // pred_region
      _
    $region21: #{_lambda_.1} parent=1 // pred_fallthru
      _
    // Predicated region
    $region22: #{_lambda_.1} parent=1 // pred_check
      _
    $region23: #{_lambda_.1} parent=1 // pred_check_branch
      %47 = sbr.rel (0) target = $region25
    $region24: #{_lambda_.1} parent=1 // pred_region
      _
    $region25: #{_lambda_.1} parent=1 // pred_fallthru
      _
    // Predicated region
    $region26: #{_lambda_.1} parent=1 // pred_check
      _
    $region27: #{_lambda_.1} parent=1 // pred_check_branch
      %49 = sbr.rel (0) target = $region29
    $region28: #{_lambda_.1} parent=1 // pred_region
      _
    $region29: #{_lambda_.1} parent=1 // pred_fallthru
      _
    // Predicated region
    $region30: #{_lambda_.1} parent=1 // pred_check
      _
    $region31: #{_lambda_.1} parent=1 // pred_check_branch
      %51 = sbr.rel (0) target = $region33
    $region32: #{_lambda_.1} parent=1 // pred_region
      %s53 = ssub.s32 1024, 1024
      %54 = vsyncadd [#allocation5], %s53
      %s55 = sshll.u32 [#allocation6], 4
      %s56 = int_to_ptr.vmem [resolvable:$true] %s55
      %61 = dma.hbm_to_vmem [thread:$0]  %s7, 1024, %s56, [#allocation5], 64, 64, 4
    $region33: #{_lambda_.1} parent=1 // pred_fallthru
      _
    // Predicated region
    $region34: #{_lambda_.1} parent=1 // pred_check
      _
    $region35: #{_lambda_.1} parent=1 // pred_check_branch
      %63 = sbr.rel (0) target = $region37
    $region36: #{_lambda_.1} parent=1 // pred_region
      _
    $region37: #{_lambda_.1} parent=1 // pred_fallthru
      _
    // Predicated region
    $region38: #{_lambda_.1} parent=1 // pred_check
      _
    $region39: #{_lambda_.1} parent=1 // pred_check_branch
      %65 = sbr.rel (0) target = $region41
    $region40: #{_lambda_.1} parent=1 // pred_region
      %66 = dma.done [#allocation3], 3200
    $region41: #{_lambda_.1} parent=1 // pred_fallthru
      _
    // Predicated region
    $region42: #{_lambda_.1} parent=1 // pred_check
      _
    $region43: #{_lambda_.1} parent=1 // pred_check_branch
      %68 = sbr.rel (0) target = $region45
    $region44: #{_lambda_.1} parent=1 // pred_region
      %69 = dma.done [#allocation5], 5120
    $region45: #{_lambda_.1} parent=1 // pred_fallthru
      _
    // Predicated region
    $region46: #{_lambda_.1} parent=1 // pred_check
      _
    $region47: #{_lambda_.1} parent=1 // pred_check_branch
      %71 = sbr.rel (0) target = $region49
    $region48: #{_lambda_.1} parent=1 // pred_region
      %72 = dma.done [#allocation5], 1024
    $region49: #{_lambda_.1} parent=1 // pred_fallthru
      _
    %v74 = vld [vmem:[%s0] sm:$0xff]
    %v75 = vpack.c.bf16 %v74, %v74
    %v76 = vld [vmem:[#allocation2] sm:$0xff]
    %v77 = vld [vmem:[#allocation2 + $0x8] sm:$0xff]
    %v78 = vld [vmem:[#allocation2 + $0x10] sm:$0xff]
    %v79 = vld [vmem:[#allocation2 + $0x18] sm:$0xff]
    %v80 = vld [vmem:[#allocation2 + $0x20] sm:$0xff]
    %v81 = vld [vmem:[#allocation2 + $0x28] sm:$0xff]
    %v82 = vld [vmem:[#allocation2 + $0x30] sm:$0xff]
    %v83 = vld [vmem:[#allocation2 + $0x38] sm:$0xff]
    %v84 = vld [vmem:[#allocation2 + $0x40] sm:$0xff]
    %v85 = vld [vmem:[#allocation2 + $0x48] sm:$0xff]
    %v86 = vld [vmem:[#allocation2 + $0x50] sm:$0xff]
    %v87 = vld [vmem:[#allocation2 + $0x58] sm:$0xff]
    %v88 = vld [vmem:[#allocation2 + $0x60] sm:$0xff]
    %v89 = vld [vmem:[#allocation2 + $0x68] sm:$0xff]
    %v90 = vld [vmem:[#allocation2 + $0x70] sm:$0xff]
    %v91 = vld [vmem:[#allocation2 + $0x78] sm:$0xff]
    %v92 = vld [vmem:[#allocation2 + $0x80] sm:$0xff]
    %v93 = vld [vmem:[#allocation2 + $0x88] sm:$0xff]
    %v94 = vld [vmem:[#allocation2 + $0x90] sm:$0xff]
    %v95 = vld [vmem:[#allocation2 + $0x98] sm:$0xff]
    %v96 = vld [vmem:[#allocation2 + $0xa0] sm:$0xff]
    %v97 = vld [vmem:[#allocation2 + $0xa8] sm:$0xff]
    %v98 = vld [vmem:[#allocation2 + $0xb0] sm:$0xff]
    %v99 = vld [vmem:[#allocation2 + $0xb8] sm:$0xff]
    %v100 = vld [vmem:[#allocation2 + $0xc0] sm:$0xff]
    %v126 = vunpack.c.l.b16 %v76
    %v127 = vunpack.c.h.b16 %v76
    %v128 = vunpack.c.l.b16 %v77
    %v129 = vunpack.c.h.b16 %v77
    %v130 = vunpack.c.l.b16 %v78
    %v131 = vunpack.c.h.b16 %v78
    %v132 = vunpack.c.l.b16 %v79
    %v133 = vunpack.c.h.b16 %v79
    %v134 = vunpack.c.l.b16 %v80
    %v135 = vunpack.c.h.b16 %v80
    %v136 = vunpack.c.l.b16 %v81
    %v137 = vunpack.c.h.b16 %v81
    %v138 = vunpack.c.l.b16 %v82
    %v139 = vunpack.c.h.b16 %v82
    %v140 = vunpack.c.l.b16 %v83
    %v141 = vunpack.c.h.b16 %v83
    %v142 = vunpack.c.l.b16 %v84
    %v143 = vunpack.c.h.b16 %v84
    %v144 = vunpack.c.l.b16 %v85
    %v145 = vunpack.c.h.b16 %v85
    %v146 = vunpack.c.l.b16 %v86
    %v147 = vunpack.c.h.b16 %v86
    %v148 = vunpack.c.l.b16 %v87
    %v149 = vunpack.c.h.b16 %v87
    %v150 = vunpack.c.l.b16 %v88
    %v151 = vunpack.c.h.b16 %v88
    %v152 = vunpack.c.l.b16 %v89
    %v153 = vunpack.c.h.b16 %v89
    %v154 = vunpack.c.l.b16 %v90
    %v155 = vunpack.c.h.b16 %v90
    %v156 = vunpack.c.l.b16 %v91
    %v157 = vunpack.c.h.b16 %v91
    %v158 = vunpack.c.l.b16 %v92
    %v159 = vunpack.c.h.b16 %v92
    %v160 = vunpack.c.l.b16 %v93
    %v161 = vunpack.c.h.b16 %v93
    %v162 = vunpack.c.l.b16 %v94
    %v163 = vunpack.c.h.b16 %v94
    %v164 = vunpack.c.l.b16 %v95
    %v165 = vunpack.c.h.b16 %v95
    %v166 = vunpack.c.l.b16 %v96
    %v167 = vunpack.c.h.b16 %v96
    %v168 = vunpack.c.l.b16 %v97
    %v169 = vunpack.c.h.b16 %v97
    %v170 = vunpack.c.l.b16 %v98
    %v171 = vunpack.c.h.b16 %v98
    %v172 = vunpack.c.l.b16 %v99
    %v173 = vunpack.c.h.b16 %v99
    %v174 = vunpack.c.l.b16 %v100
    %v175 = vunpack.c.h.b16 %v100
    %v176 = vpack.c.b16 %v136, %v126
    %v177 = vpack.c.b16 %v137, %v127
    %v178 = vpack.c.b16 %v138, %v128
    %v179 = vpack.c.b16 %v139, %v129
    %v180 = vpack.c.b16 %v140, %v130
    %v181 = vpack.c.b16 %v141, %v131
    %v182 = vpack.c.b16 %v142, %v132
    %v183 = vpack.c.b16 %v143, %v133
    %v184 = vpack.c.b16 %v144, %v134
    %v185 = vpack.c.b16 %v145, %v135
    %v186 = vpack.c.b16 %v156, %v146
    %v187 = vpack.c.b16 %v157, %v147
    %v188 = vpack.c.b16 %v158, %v148
    %v189 = vpack.c.b16 %v159, %v149
    %v190 = vpack.c.b16 %v160, %v150
    %v191 = vpack.c.b16 %v161, %v151
    %v192 = vpack.c.b16 %v162, %v152
    %v193 = vpack.c.b16 %v163, %v153
    %v194 = vpack.c.b16 %v164, %v154
    %v195 = vpack.c.b16 %v165, %v155
    %v196 = vpack.c.b16 %v166, %v166
    %v197 = vpack.c.b16 %v167, %v167
    %v198 = vpack.c.b16 %v168, %v168
    %v199 = vpack.c.b16 %v169, %v169
    %v200 = vpack.c.b16 %v170, %v170
    %v201 = vpack.c.b16 %v171, %v171
    %v202 = vpack.c.b16 %v172, %v172
    %v203 = vpack.c.b16 %v173, %v173
    %v204 = vpack.c.b16 %v174, %v174
    %v205 = vpack.c.b16 %v175, %v175
    %vm226 = vcmask 326656
    %v228 = vsel %vm226, %v75, 0
    %vm230 = vcmask 1043456
    %v232 = vsel %vm230, %v196, 0
    %v235 = vsel %vm230, %v197, 0
    %v238 = vsel %vm230, %v198, 0
    %v241 = vsel %vm230, %v199, 0
    %v244 = vsel %vm230, %v200, 0
    %v247 = vsel %vm230, %v201, 0
    %v250 = vsel %vm230, %v202, 0
    %v253 = vsel %vm230, %v203, 0
    %v256 = vsel %vm230, %v204, 0
    %v259 = vsel %vm230, %v205, 0
    %261 = vmatprep.subr.bf16.mxu0 %v177
    %262 = vmatpush1.bf16.msra.mxu0 %v176
    %263 = vmatprep.subr.bf16.mxu0 %v187
    %264 = vmatpush1.bf16.msra.mxu0 %v186
    %265 = vmatprep.subr.bf16.mxu0 %v235
    %266 = vmatpush1.bf16.msra.mxu0 %v232
    %267 = vmatprep.subr.bf16.mxu0 0
    %268 = vmatpush1.bf16.msra.mxu0 0
    %269 = vmatprep.subr.bf16.mxu0 0
    %270 = vmatpush1.bf16.msra.mxu0 0
    %271 = vmatprep.subr.bf16.mxu0 0
    %272 = vmatpush1.bf16.msra.mxu0 0
    %273 = vmatprep.subr.bf16.mxu0 0
    %274 = vmatpush1.bf16.msra.mxu0 0
    %275 = vmatprep.subr.bf16.mxu0 0
    %276 = vmatpush1.bf16.msra.mxu0 0
    %277 = vmatprep.subr.bf16.mxu0 0
    %278 = vmatpush1.bf16.msra.mxu0 0
    %279 = vmatprep.subr.bf16.mxu0 0
    %280 = vmatpush1.bf16.msra.mxu0 0
    %281 = vmatprep.subr.bf16.mxu0 0
    %282 = vmatpush1.bf16.msra.mxu0 0
    %283 = vmatprep.subr.bf16.mxu0 0
    %284 = vmatpush1.bf16.msra.mxu0 0
    %285 = vmatprep.subr.bf16.mxu0 0
    %286 = vmatpush1.bf16.msra.mxu0 0
    %287 = vmatprep.subr.bf16.mxu0 0
    %288 = vmatpush1.bf16.msra.mxu0 0
    %289 = vmatprep.subr.bf16.mxu0 0
    %290 = vmatpush1.bf16.msra.mxu0 0
    %291 = vmatprep.subr.bf16.mxu0 0
    %292 = vmatpush1.bf16.msra.mxu0 0
    %293 = vmatprep.mubr.bf16.mxu0 0
    %294 = vmatmul.mubr.bf16.gmra.mrb[0].mxu0 %v228
    %v295 = vpop.f32.mrb[0].mxu0
    %v296 = vadd.f32 0.0, %v295
    %v297 = vpop.f32.mrb[0].mxu0
    %v298 = vadd.f32 0.0, %v297
    %v299 = vpop.f32.mrb[0].mxu0
    %v300 = vpop.f32.mrb[0].mxu0
    %301 = vdwg.mxu0
    %302 = vmatprep.subr.bf16.mxu0 %v179
    %303 = vmatpush1.bf16.msra.mxu0 %v178
    %304 = vmatprep.subr.bf16.mxu0 %v189
    %305 = vmatpush1.bf16.msra.mxu0 %v188
    %306 = vmatprep.subr.bf16.mxu0 %v241
    %307 = vmatpush1.bf16.msra.mxu0 %v238
    %308 = vmatprep.subr.bf16.mxu0 0
    %309 = vmatpush1.bf16.msra.mxu0 0
    %310 = vmatprep.subr.bf16.mxu0 0
    %311 = vmatpush1.bf16.msra.mxu0 0
    %312 = vmatprep.subr.bf16.mxu0 0
    %313 = vmatpush1.bf16.msra.mxu0 0
    %314 = vmatprep.subr.bf16.mxu0 0
    %315 = vmatpush1.bf16.msra.mxu0 0
    %316 = vmatprep.subr.bf16.mxu0 0
    %317 = vmatpush1.bf16.msra.mxu0 0
    %318 = vmatprep.subr.bf16.mxu0 0
    %319 = vmatpush1.bf16.msra.mxu0 0
    %320 = vmatprep.subr.bf16.mxu0 0
    %321 = vmatpush1.bf16.msra.mxu0 0
    %322 = vmatprep.subr.bf16.mxu0 0
    %323 = vmatpush1.bf16.msra.mxu0 0
    %324 = vmatprep.subr.bf16.mxu0 0
    %325 = vmatpush1.bf16.msra.mxu0 0
    %326 = vmatprep.subr.bf16.mxu0 0
    %327 = vmatpush1.bf16.msra.mxu0 0
    %328 = vmatprep.subr.bf16.mxu0 0
    %329 = vmatpush1.bf16.msra.mxu0 0
    %330 = vmatprep.subr.bf16.mxu0 0
    %331 = vmatpush1.bf16.msra.mxu0 0
    %332 = vmatprep.subr.bf16.mxu0 0
    %333 = vmatpush1.bf16.msra.mxu0 0
    %334 = vmatprep.mubr.bf16.mxu0 0
    %335 = vmatmul.mubr.bf16.gmra.mrb[0].mxu0 %v228
    %v336 = vpop.f32.mrb[0].mxu0
    %v337 = vadd.f32 0.0, %v336
    %v338 = vpop.f32.mrb[0].mxu0
    %v339 = vadd.f32 0.0, %v338
    %v340 = vpop.f32.mrb[0].mxu0
    %v341 = vpop.f32.mrb[0].mxu0
    %342 = vdwg.mxu0
    %343 = vmatprep.subr.bf16.mxu0 %v181
    %344 = vmatpush1.bf16.msra.mxu0 %v180
    %345 = vmatprep.subr.bf16.mxu0 %v191
    %346 = vmatpush1.bf16.msra.mxu0 %v190
    %347 = vmatprep.subr.bf16.mxu0 %v247
    %348 = vmatpush1.bf16.msra.mxu0 %v244
    %349 = vmatprep.subr.bf16.mxu0 0
    %350 = vmatpush1.bf16.msra.mxu0 0
    %351 = vmatprep.subr.bf16.mxu0 0
    %352 = vmatpush1.bf16.msra.mxu0 0
    %353 = vmatprep.subr.bf16.mxu0 0
    %354 = vmatpush1.bf16.msra.mxu0 0
    %355 = vmatprep.subr.bf16.mxu0 0
    %356 = vmatpush1.bf16.msra.mxu0 0
    %357 = vmatprep.subr.bf16.mxu0 0
    %358 = vmatpush1.bf16.msra.mxu0 0
    %359 = vmatprep.subr.bf16.mxu0 0
    %360 = vmatpush1.bf16.msra.mxu0 0
    %361 = vmatprep.subr.bf16.mxu0 0
    %362 = vmatpush1.bf16.msra.mxu0 0
    %363 = vmatprep.subr.bf16.mxu0 0
    %364 = vmatpush1.bf16.msra.mxu0 0
    %365 = vmatprep.subr.bf16.mxu0 0
    %366 = vmatpush1.bf16.msra.mxu0 0
    %367 = vmatprep.subr.bf16.mxu0 0
    %368 = vmatpush1.bf16.msra.mxu0 0
    %369 = vmatprep.subr.bf16.mxu0 0
    %370 = vmatpush1.bf16.msra.mxu0 0
    %371 = vmatprep.subr.bf16.mxu0 0
    %372 = vmatpush1.bf16.msra.mxu0 0
    %373 = vmatprep.subr.bf16.mxu0 0
    %374 = vmatpush1.bf16.msra.mxu0 0
    %375 = vmatprep.mubr.bf16.mxu0 0
    %376 = vmatmul.mubr.bf16.gmra.mrb[0].mxu0 %v228
    %v377 = vpop.f32.mrb[0].mxu0
    %v378 = vadd.f32 0.0, %v377
    %v379 = vpop.f32.mrb[0].mxu0
    %v380 = vadd.f32 0.0, %v379
    %v381 = vpop.f32.mrb[0].mxu0
    %v382 = vpop.f32.mrb[0].mxu0
    %383 = vdwg.mxu0
    %384 = vmatprep.subr.bf16.mxu0 %v183
    %385 = vmatpush1.bf16.msra.mxu0 %v182
    %386 = vmatprep.subr.bf16.mxu0 %v193
    %387 = vmatpush1.bf16.msra.mxu0 %v192
    %388 = vmatprep.subr.bf16.mxu0 %v253
    %389 = vmatpush1.bf16.msra.mxu0 %v250
    %390 = vmatprep.subr.bf16.mxu0 0
    %391 = vmatpush1.bf16.msra.mxu0 0
    %392 = vmatprep.subr.bf16.mxu0 0
    %393 = vmatpush1.bf16.msra.mxu0 0
    %394 = vmatprep.subr.bf16.mxu0 0
    %395 = vmatpush1.bf16.msra.mxu0 0
    %396 = vmatprep.subr.bf16.mxu0 0
    %397 = vmatpush1.bf16.msra.mxu0 0
    %398 = vmatprep.subr.bf16.mxu0 0
    %399 = vmatpush1.bf16.msra.mxu0 0
    %400 = vmatprep.subr.bf16.mxu0 0
    %401 = vmatpush1.bf16.msra.mxu0 0
    %402 = vmatprep.subr.bf16.mxu0 0
    %403 = vmatpush1.bf16.msra.mxu0 0
    %404 = vmatprep.subr.bf16.mxu0 0
    %405 = vmatpush1.bf16.msra.mxu0 0
    %406 = vmatprep.subr.bf16.mxu0 0
    %407 = vmatpush1.bf16.msra.mxu0 0
    %408 = vmatprep.subr.bf16.mxu0 0
    %409 = vmatpush1.bf16.msra.mxu0 0
    %410 = vmatprep.subr.bf16.mxu0 0
    %411 = vmatpush1.bf16.msra.mxu0 0
    %412 = vmatprep.subr.bf16.mxu0 0
    %413 = vmatpush1.bf16.msra.mxu0 0
    %414 = vmatprep.subr.bf16.mxu0 0
    %415 = vmatpush1.bf16.msra.mxu0 0
    %416 = vmatprep.mubr.bf16.mxu0 0
    %417 = vmatmul.mubr.bf16.gmra.mrb[0].mxu0 %v228
    %v418 = vpop.f32.mrb[0].mxu0
    %v419 = vadd.f32 0.0, %v418
    %v420 = vpop.f32.mrb[0].mxu0
    %v421 = vadd.f32 0.0, %v420
    %v422 = vpop.f32.mrb[0].mxu0
    %v423 = vpop.f32.mrb[0].mxu0
    %424 = vdwg.mxu0
    %425 = vmatprep.subr.bf16.mxu0 %v185
    %426 = vmatpush1.bf16.msra.mxu0 %v184
    %427 = vmatprep.subr.bf16.mxu0 %v195
    %428 = vmatpush1.bf16.msra.mxu0 %v194
    %429 = vmatprep.subr.bf16.mxu0 %v259
    %430 = vmatpush1.bf16.msra.mxu0 %v256
    %431 = vmatprep.subr.bf16.mxu0 0
    %432 = vmatpush1.bf16.msra.mxu0 0
    %433 = vmatprep.subr.bf16.mxu0 0
    %434 = vmatpush1.bf16.msra.mxu0 0
    %435 = vmatprep.subr.bf16.mxu0 0
    %436 = vmatpush1.bf16.msra.mxu0 0
    %437 = vmatprep.subr.bf16.mxu0 0
    %438 = vmatpush1.bf16.msra.mxu0 0
    %439 = vmatprep.subr.bf16.mxu0 0
    %440 = vmatpush1.bf16.msra.mxu0 0
    %441 = vmatprep.subr.bf16.mxu0 0
    %442 = vmatpush1.bf16.msra.mxu0 0
    %443 = vmatprep.subr.bf16.mxu0 0
    %444 = vmatpush1.bf16.msra.mxu0 0
    %445 = vmatprep.subr.bf16.mxu0 0
    %446 = vmatpush1.bf16.msra.mxu0 0
    %447 = vmatprep.subr.bf16.mxu0 0
    %448 = vmatpush1.bf16.msra.mxu0 0
    %449 = vmatprep.subr.bf16.mxu0 0
    %450 = vmatpush1.bf16.msra.mxu0 0
    %451 = vmatprep.subr.bf16.mxu0 0
    %452 = vmatpush1.bf16.msra.mxu0 0
    %453 = vmatprep.subr.bf16.mxu0 0
    %454 = vmatpush1.bf16.msra.mxu0 0
    %455 = vmatprep.subr.bf16.mxu0 0
    %456 = vmatpush1.bf16.msra.mxu0 0
    %457 = vmatprep.mubr.bf16.mxu0 0
    %458 = vmatmul.mubr.bf16.gmra.mrb[0].mxu0 %v228
    %v459 = vpop.f32.mrb[0].mxu0
    %v460 = vadd.f32 0.0, %v459
    %v461 = vpop.f32.mrb[0].mxu0
    %v462 = vadd.f32 0.0, %v461
    %v463 = vpop.f32.mrb[0].mxu0
    %v464 = vpop.f32.mrb[0].mxu0
    %465 = vdwg.mxu0
    %v466 = vmax.f32 %v296, %v380
    %v467 = vmax.f32 %v298, %v419
    %v468 = vmax.f32 %v337, %v421
    %v469 = vmax.f32 %v339, %v460
    %v470 = vmax.f32 %v378, %v462
    %v471 = vld [vmem:[%s2] sm:$0x1f]
    %v473 = vlaneseq
    %v474 = vshrl.u32 %v473, 7
    %v475 = vsub.s32 0, %v474
    %v476 = vrot.slane %v471, %v475
    %v477 = vlaneseq
    %v478 = vshrl.u32 %v477, 7
    %v479 = vsub.s32 1, %v478
    %v480 = vrot.slane %v471, %v479
    %v481 = vlaneseq
    %v482 = vshrl.u32 %v481, 7
    %v483 = vsub.s32 2, %v482
    %v484 = vrot.slane %v471, %v483
    %v485 = vlaneseq
    %v486 = vshrl.u32 %v485, 7
    %v487 = vsub.s32 3, %v486
    %v488 = vrot.slane %v471, %v487
    %v489 = vlaneseq
    %v490 = vshrl.u32 %v489, 7
    %v491 = vsub.s32 4, %v490
    %v492 = vrot.slane %v471, %v491
    %v498 = vadd.f32 %v466, %v476
    %v499 = vadd.f32 %v467, %v480
    %v500 = vadd.f32 %v468, %v484
    %v501 = vadd.f32 %v469, %v488
    %v502 = vadd.f32 %v470, %v492
    %v503 = vmax.f32 %v498, 0.0
    %v504 = vmax.f32 %v499, 0.0
    %v505 = vmax.f32 %v500, 0.0
    %v506 = vmax.f32 %v501, 0.0
    %v507 = vmax.f32 %v502, 0.0
    %v508 = vpack.c.bf16 %v503, %v503
    %v509 = vpack.c.bf16 %v504, %v504
    %v510 = vpack.c.bf16 %v505, %v505
    %v511 = vpack.c.bf16 %v506, %v506
    %v512 = vpack.c.bf16 %v507, %v507
    %v513 = vld [vmem:[#allocation4] sm:$0xf]
    %v514 = vld [vmem:[#allocation4 + $0x4] sm:$0xf]
    %v515 = vld [vmem:[#allocation4 + $0x8] sm:$0xf]
    %v516 = vld [vmem:[#allocation4 + $0xc] sm:$0xf]
    %v517 = vld [vmem:[#allocation4 + $0x10] sm:$0xf]
    %v518 = vld [vmem:[#allocation4 + $0x14] sm:$0xf]
    %v519 = vld [vmem:[#allocation4 + $0x18] sm:$0xf]
    %v520 = vld [vmem:[#allocation4 + $0x1c] sm:$0xf]
    %v521 = vld [vmem:[#allocation4 + $0x20] sm:$0xf]
    %v522 = vld [vmem:[#allocation4 + $0x24] sm:$0xf]
    %v523 = vld [vmem:[#allocation4 + $0x28] sm:$0xf]
    %v524 = vld [vmem:[#allocation4 + $0x2c] sm:$0xf]
    %v525 = vld [vmem:[#allocation4 + $0x30] sm:$0xf]
    %v526 = vld [vmem:[#allocation4 + $0x34] sm:$0xf]
    %v527 = vld [vmem:[#allocation4 + $0x38] sm:$0xf]
    %v528 = vld [vmem:[#allocation4 + $0x3c] sm:$0xf]
    %v529 = vld [vmem:[#allocation4 + $0x40] sm:$0xf]
    %v530 = vld [vmem:[#allocation4 + $0x44] sm:$0xf]
    %v531 = vld [vmem:[#allocation4 + $0x48] sm:$0xf]
    %v532 = vld [vmem:[#allocation4 + $0x4c] sm:$0xf]
    %v533 = vld [vmem:[#allocation4 + $0x50] sm:$0xf]
    %v534 = vld [vmem:[#allocation4 + $0x54] sm:$0xf]
    %v535 = vld [vmem:[#allocation4 + $0x58] sm:$0xf]
    %v536 = vld [vmem:[#allocation4 + $0x5c] sm:$0xf]
    %v537 = vld [vmem:[#allocation4 + $0x60] sm:$0xf]
    %v538 = vld [vmem:[#allocation4 + $0x64] sm:$0xf]
    %v539 = vld [vmem:[#allocation4 + $0x68] sm:$0xf]
    %v540 = vld [vmem:[#allocation4 + $0x6c] sm:$0xf]
    %v541 = vld [vmem:[#allocation4 + $0x70] sm:$0xf]
    %v542 = vld [vmem:[#allocation4 + $0x74] sm:$0xf]
    %v543 = vld [vmem:[#allocation4 + $0x78] sm:$0xf]
    %v544 = vld [vmem:[#allocation4 + $0x7c] sm:$0xf]
    %v545 = vld [vmem:[#allocation4 + $0x80] sm:$0xf]
    %v546 = vld [vmem:[#allocation4 + $0x84] sm:$0xf]
    %v547 = vld [vmem:[#allocation4 + $0x88] sm:$0xf]
    %v548 = vld [vmem:[#allocation4 + $0x8c] sm:$0xf]
    %v549 = vld [vmem:[#allocation4 + $0x90] sm:$0xf]
    %v550 = vld [vmem:[#allocation4 + $0x94] sm:$0xf]
    %v551 = vld [vmem:[#allocation4 + $0x98] sm:$0xf]
    %v552 = vld [vmem:[#allocation4 + $0x9c] sm:$0xf]
    %v553 = vld [vmem:[#allocation4 + $0xa0] sm:$0xf]
    %v554 = vld [vmem:[#allocation4 + $0xa4] sm:$0xf]
    %v555 = vld [vmem:[#allocation4 + $0xa8] sm:$0xf]
    %v556 = vld [vmem:[#allocation4 + $0xac] sm:$0xf]
    %v557 = vld [vmem:[#allocation4 + $0xb0] sm:$0xf]
    %v558 = vld [vmem:[#allocation4 + $0xb4] sm:$0xf]
    %v559 = vld [vmem:[#allocation4 + $0xb8] sm:$0xf]
    %v560 = vld [vmem:[#allocation4 + $0xbc] sm:$0xf]
    %v561 = vld [vmem:[#allocation4 + $0xc0] sm:$0xf]
    %v562 = vld [vmem:[#allocation4 + $0xc4] sm:$0xf]
    %v563 = vld [vmem:[#allocation4 + $0xc8] sm:$0xf]
    %v564 = vld [vmem:[#allocation4 + $0xcc] sm:$0xf]
    %v565 = vld [vmem:[#allocation4 + $0xd0] sm:$0xf]
    %v566 = vld [vmem:[#allocation4 + $0xd4] sm:$0xf]
    %v567 = vld [vmem:[#allocation4 + $0xd8] sm:$0xf]
    %v568 = vld [vmem:[#allocation4 + $0xdc] sm:$0xf]
    %v569 = vld [vmem:[#allocation4 + $0xe0] sm:$0xf]
    %v570 = vld [vmem:[#allocation4 + $0xe4] sm:$0xf]
    %v571 = vld [vmem:[#allocation4 + $0xe8] sm:$0xf]
    %v572 = vld [vmem:[#allocation4 + $0xec] sm:$0xf]
    %v573 = vld [vmem:[#allocation4 + $0xf0] sm:$0xf]
    %v574 = vld [vmem:[#allocation4 + $0xf4] sm:$0xf]
    %v575 = vld [vmem:[#allocation4 + $0xf8] sm:$0xf]
    %v576 = vld [vmem:[#allocation4 + $0xfc] sm:$0xf]
    %v577 = vld [vmem:[#allocation4 + $0x100] sm:$0xf]
    %v578 = vld [vmem:[#allocation4 + $0x104] sm:$0xf]
    %v579 = vld [vmem:[#allocation4 + $0x108] sm:$0xf]
    %v580 = vld [vmem:[#allocation4 + $0x10c] sm:$0xf]
    %v581 = vld [vmem:[#allocation4 + $0x110] sm:$0xf]
    %v582 = vld [vmem:[#allocation4 + $0x114] sm:$0xf]
    %v583 = vld [vmem:[#allocation4 + $0x118] sm:$0xf]
    %v584 = vld [vmem:[#allocation4 + $0x11c] sm:$0xf]
    %v585 = vld [vmem:[#allocation4 + $0x120] sm:$0xf]
    %v586 = vld [vmem:[#allocation4 + $0x124] sm:$0xf]
    %v587 = vld [vmem:[#allocation4 + $0x128] sm:$0xf]
    %v588 = vld [vmem:[#allocation4 + $0x12c] sm:$0xf]
    %v589 = vld [vmem:[#allocation4 + $0x130] sm:$0xf]
    %v590 = vld [vmem:[#allocation4 + $0x134] sm:$0xf]
    %v591 = vld [vmem:[#allocation4 + $0x138] sm:$0xf]
    %v592 = vld [vmem:[#allocation4 + $0x13c] sm:$0xf]
    %v593 = vld [vmem:[%s4] sm:$0x1]
    %v595 = vlaneseq
    %v596 = vshrl.u32 %v595, 7
    %v597 = vsub.s32 0, %v596
    %v598 = vrot.slane %v593, %v597
    %v680 = vunpack.c.l.b16 %v513
    %v681 = vunpack.c.l.b16 %v514
    %v682 = vunpack.c.l.b16 %v515
    %v683 = vunpack.c.l.b16 %v516
    %v684 = vunpack.c.l.b16 %v517
    %v685 = vunpack.c.l.b16 %v518
    %v686 = vunpack.c.l.b16 %v519
    %v687 = vunpack.c.l.b16 %v520
    %v688 = vunpack.c.l.b16 %v521
    %v689 = vunpack.c.l.b16 %v522
    %v690 = vunpack.c.l.b16 %v523
    %v691 = vunpack.c.l.b16 %v524
    %v692 = vunpack.c.l.b16 %v525
    %v693 = vunpack.c.l.b16 %v526
    %v694 = vunpack.c.l.b16 %v527
    %v695 = vunpack.c.l.b16 %v528
    %v696 = vunpack.c.l.b16 %v529
    %v697 = vunpack.c.l.b16 %v530
    %v698 = vunpack.c.l.b16 %v531
    %v699 = vunpack.c.l.b16 %v532
    %v700 = vunpack.c.l.b16 %v533
    %v701 = vunpack.c.l.b16 %v534
    %v702 = vunpack.c.l.b16 %v535
    %v703 = vunpack.c.l.b16 %v536
    %v704 = vunpack.c.l.b16 %v537
    %v705 = vunpack.c.l.b16 %v538
    %v706 = vunpack.c.l.b16 %v539
    %v707 = vunpack.c.l.b16 %v540
    %v708 = vunpack.c.l.b16 %v541
    %v709 = vunpack.c.l.b16 %v542
    %v710 = vunpack.c.l.b16 %v543
    %v711 = vunpack.c.l.b16 %v544
    %v712 = vunpack.c.l.b16 %v545
    %v713 = vunpack.c.l.b16 %v546
    %v714 = vunpack.c.l.b16 %v547
    %v715 = vunpack.c.l.b16 %v548
    %v716 = vunpack.c.l.b16 %v549
    %v717 = vunpack.c.l.b16 %v550
    %v718 = vunpack.c.l.b16 %v551
    %v719 = vunpack.c.l.b16 %v552
    %v720 = vunpack.c.l.b16 %v553
    %v721 = vunpack.c.l.b16 %v554
    %v722 = vunpack.c.l.b16 %v555
    %v723 = vunpack.c.l.b16 %v556
    %v724 = vunpack.c.l.b16 %v557
    %v725 = vunpack.c.l.b16 %v558
    %v726 = vunpack.c.l.b16 %v559
    %v727 = vunpack.c.l.b16 %v560
    %v728 = vunpack.c.l.b16 %v561
    %v729 = vunpack.c.l.b16 %v562
    %v730 = vunpack.c.l.b16 %v563
    %v731 = vunpack.c.l.b16 %v564
    %v732 = vunpack.c.l.b16 %v565
    %v733 = vunpack.c.l.b16 %v566
    %v734 = vunpack.c.l.b16 %v567
    %v735 = vunpack.c.l.b16 %v568
    %v736 = vunpack.c.l.b16 %v569
    %v737 = vunpack.c.l.b16 %v570
    %v738 = vunpack.c.l.b16 %v571
    %v739 = vunpack.c.l.b16 %v572
    %v740 = vunpack.c.l.b16 %v573
    %v741 = vunpack.c.l.b16 %v574
    %v742 = vunpack.c.l.b16 %v575
    %v743 = vunpack.c.l.b16 %v576
    %v744 = vunpack.c.l.b16 %v577
    %v745 = vunpack.c.l.b16 %v578
    %v746 = vunpack.c.l.b16 %v579
    %v747 = vunpack.c.l.b16 %v580
    %v748 = vunpack.c.l.b16 %v581
    %v749 = vunpack.c.l.b16 %v582
    %v750 = vunpack.c.l.b16 %v583
    %v751 = vunpack.c.l.b16 %v584
    %v752 = vunpack.c.l.b16 %v585
    %v753 = vunpack.c.l.b16 %v586
    %v754 = vunpack.c.l.b16 %v587
    %v755 = vunpack.c.l.b16 %v588
    %v756 = vunpack.c.l.b16 %v589
    %v757 = vunpack.c.l.b16 %v590
    %v758 = vunpack.c.l.b16 %v591
    %v759 = vunpack.c.l.b16 %v592
    %v760 = vpack.c.b16 %v681, %v680
    %v761 = vpack.c.b16 %v683, %v682
    %v762 = vpack.c.b16 %v685, %v684
    %v763 = vpack.c.b16 %v687, %v686
    %v764 = vpack.c.b16 %v689, %v688
    %v765 = vpack.c.b16 %v691, %v690
    %v766 = vpack.c.b16 %v693, %v692
    %v767 = vpack.c.b16 %v695, %v694
    %v768 = vpack.c.b16 %v697, %v696
    %v769 = vpack.c.b16 %v699, %v698
    %v770 = vpack.c.b16 %v701, %v700
    %v771 = vpack.c.b16 %v703, %v702
    %v772 = vpack.c.b16 %v705, %v704
    %v773 = vpack.c.b16 %v707, %v706
    %v774 = vpack.c.b16 %v709, %v708
    %v775 = vpack.c.b16 %v711, %v710
    %v776 = vpack.c.b16 %v713, %v712
    %v777 = vpack.c.b16 %v715, %v714
    %v778 = vpack.c.b16 %v717, %v716
    %v779 = vpack.c.b16 %v719, %v718
    %v780 = vpack.c.b16 %v721, %v720
    %v781 = vpack.c.b16 %v723, %v722
    %v782 = vpack.c.b16 %v725, %v724
    %v783 = vpack.c.b16 %v727, %v726
    %v784 = vpack.c.b16 %v729, %v728
    %v785 = vpack.c.b16 %v731, %v730
    %v786 = vpack.c.b16 %v733, %v732
    %v787 = vpack.c.b16 %v735, %v734
    %v788 = vpack.c.b16 %v737, %v736
    %v789 = vpack.c.b16 %v739, %v738
    %v790 = vpack.c.b16 %v741, %v740
    %v791 = vpack.c.b16 %v743, %v742
    %v792 = vpack.c.b16 %v745, %v744
    %v793 = vpack.c.b16 %v747, %v746
    %v794 = vpack.c.b16 %v749, %v748
    %v795 = vpack.c.b16 %v751, %v750
    %v796 = vpack.c.b16 %v753, %v752
    %v797 = vpack.c.b16 %v755, %v754
    %v798 = vpack.c.b16 %v757, %v756
    %v799 = vpack.c.b16 %v759, %v758
    %840 = vmatprep.subr.bf16.mxu0 0
    %841 = vmatpush1.bf16.msra.mxu0 %v760
    %842 = vmatprep.subr.bf16.mxu0 0
    %843 = vmatpush1.bf16.msra.mxu0 %v761
    %844 = vmatprep.subr.bf16.mxu0 0
    %845 = vmatpush1.bf16.msra.mxu0 %v762
    %846 = vmatprep.subr.bf16.mxu0 0
    %847 = vmatpush1.bf16.msra.mxu0 %v763
    %848 = vmatprep.subr.bf16.mxu0 0
    %849 = vmatpush1.bf16.msra.mxu0 %v764
    %850 = vmatprep.subr.bf16.mxu0 0
    %851 = vmatpush1.bf16.msra.mxu0 %v765
    %852 = vmatprep.subr.bf16.mxu0 0
    %853 = vmatpush1.bf16.msra.mxu0 %v766
    %854 = vmatprep.subr.bf16.mxu0 0
    %855 = vmatpush1.bf16.msra.mxu0 %v767
    %856 = vmatprep.subr.bf16.mxu0 0
    %857 = vmatpush1.bf16.msra.mxu0 %v768
    %858 = vmatprep.subr.bf16.mxu0 0
    %859 = vmatpush1.bf16.msra.mxu0 %v769
    %860 = vmatprep.subr.bf16.mxu0 0
    %861 = vmatpush1.bf16.msra.mxu0 %v770
    %862 = vmatprep.subr.bf16.mxu0 0
    %863 = vmatpush1.bf16.msra.mxu0 %v771
    %864 = vmatprep.subr.bf16.mxu0 0
    %865 = vmatpush1.bf16.msra.mxu0 %v772
    %866 = vmatprep.subr.bf16.mxu0 0
    %867 = vmatpush1.bf16.msra.mxu0 %v773
    %868 = vmatprep.subr.bf16.mxu0 0
    %869 = vmatpush1.bf16.msra.mxu0 %v774
    %870 = vmatprep.subr.bf16.mxu0 0
    %871 = vmatpush1.bf16.msra.mxu0 %v775
    %872 = vmatprep.mubr.bf16.mxu0 %v509
    %873 = vmatmul.mubr.bf16.gmra.mrb[0].mxu0 %v508
    %v874 = vpop.f32.mrb[0].mxu0
    %v875 = vadd.f32 %v598, %v874
    %v876 = vpop.f32.mrb[0].mxu0
    %v877 = vpop.f32.mrb[0].mxu0
    %v878 = vpop.f32.mrb[0].mxu0
    %879 = vdwg.mxu0
    %880 = vmatprep.subr.bf16.mxu0 0
    %881 = vmatpush1.bf16.msra.mxu0 %v776
    %882 = vmatprep.subr.bf16.mxu0 0
    %883 = vmatpush1.bf16.msra.mxu0 %v777
    %884 = vmatprep.subr.bf16.mxu0 0
    %885 = vmatpush1.bf16.msra.mxu0 %v778
    %886 = vmatprep.subr.bf16.mxu0 0
    %887 = vmatpush1.bf16.msra.mxu0 %v779
    %888 = vmatprep.subr.bf16.mxu0 0
    %889 = vmatpush1.bf16.msra.mxu0 %v780
    %890 = vmatprep.subr.bf16.mxu0 0
    %891 = vmatpush1.bf16.msra.mxu0 %v781
    %892 = vmatprep.subr.bf16.mxu0 0
    %893 = vmatpush1.bf16.msra.mxu0 %v782
    %894 = vmatprep.subr.bf16.mxu0 0
    %895 = vmatpush1.bf16.msra.mxu0 %v783
    %896 = vmatprep.subr.bf16.mxu0 0
    %897 = vmatpush1.bf16.msra.mxu0 %v784
    %898 = vmatprep.subr.bf16.mxu0 0
    %899 = vmatpush1.bf16.msra.mxu0 %v785
    %900 = vmatprep.subr.bf16.mxu0 0
    %901 = vmatpush1.bf16.msra.mxu0 %v786
    %902 = vmatprep.subr.bf16.mxu0 0
    %903 = vmatpush1.bf16.msra.mxu0 %v787
    %904 = vmatprep.subr.bf16.mxu0 0
    %905 = vmatpush1.bf16.msra.mxu0 %v788
    %906 = vmatprep.subr.bf16.mxu0 0
    %907 = vmatpush1.bf16.msra.mxu0 %v789
    %908 = vmatprep.subr.bf16.mxu0 0
    %909 = vmatpush1.bf16.msra.mxu0 %v790
    %910 = vmatprep.subr.bf16.mxu0 0
    %911 = vmatpush1.bf16.msra.mxu0 %v791
    %912 = vmatprep.mubr.bf16.mxu0 %v511
    %913 = vmatmul.mubr.bf16.gmra.mrb[0].mxu0 %v510
    %v914 = vpop.f32.mrb[0].mxu0
    %v915 = vadd.f32 %v875, %v914
    %v916 = vpop.f32.mrb[0].mxu0
    %v917 = vpop.f32.mrb[0].mxu0
    %v918 = vpop.f32.mrb[0].mxu0
    %919 = vdwg.mxu0
    %920 = vmatprep.subr.bf16.mxu0 0
    %921 = vmatpush1.bf16.msra.mxu0 %v792
    %922 = vmatprep.subr.bf16.mxu0 0
    %923 = vmatpush1.bf16.msra.mxu0 %v793
    %924 = vmatprep.subr.bf16.mxu0 0
    %925 = vmatpush1.bf16.msra.mxu0 %v794
    %926 = vmatprep.subr.bf16.mxu0 0
    %927 = vmatpush1.bf16.msra.mxu0 %v795
    %928 = vmatprep.subr.bf16.mxu0 0
    %929 = vmatpush1.bf16.msra.mxu0 %v796
    %930 = vmatprep.subr.bf16.mxu0 0
    %931 = vmatpush1.bf16.msra.mxu0 %v797
    %932 = vmatprep.subr.bf16.mxu0 0
    %933 = vmatpush1.bf16.msra.mxu0 %v798
    %934 = vmatprep.subr.bf16.mxu0 0
    %935 = vmatpush1.bf16.msra.mxu0 %v799
    %936 = vmatprep.subr.bf16.mxu0 0
    %937 = vmatpush1.bf16.msra.mxu0 0
    %938 = vmatprep.subr.bf16.mxu0 0
    %939 = vmatpush1.bf16.msra.mxu0 0
    %940 = vmatprep.subr.bf16.mxu0 0
    %941 = vmatpush1.bf16.msra.mxu0 0
    %942 = vmatprep.subr.bf16.mxu0 0
    %943 = vmatpush1.bf16.msra.mxu0 0
    %944 = vmatprep.subr.bf16.mxu0 0
    %945 = vmatpush1.bf16.msra.mxu0 0
    %946 = vmatprep.subr.bf16.mxu0 0
    %947 = vmatpush1.bf16.msra.mxu0 0
    %948 = vmatprep.subr.bf16.mxu0 0
    %949 = vmatpush1.bf16.msra.mxu0 0
    %950 = vmatprep.subr.bf16.mxu0 0
    %951 = vmatpush1.bf16.msra.mxu0 0
    %952 = vmatprep.mubr.bf16.mxu0 0
    %953 = vmatmul.mubr.bf16.gmra.mrb[0].mxu0 %v512
    %v954 = vpop.f32.mrb[0].mxu0
    %v955 = vadd.f32 %v915, %v954
    %v956 = vpop.f32.mrb[0].mxu0
    %v957 = vpop.f32.mrb[0].mxu0
    %v958 = vpop.f32.mrb[0].mxu0
    %959 = vdwg.mxu0
    %v960 = vtanh.pop %v955
    %v961 = vpack.c.bf16 %v960, %v960
    %v962 = vld [vmem:[%s5] sm:$0xf]
    %v963 = vld [vmem:[%s5 + $0x4] sm:$0xf]
    %v964 = vld [vmem:[%s5 + $0x8] sm:$0xf]
    %v965 = vld [vmem:[%s5 + $0xc] sm:$0xf]
    %v966 = vld [vmem:[%s5 + $0x10] sm:$0xf]
    %v967 = vld [vmem:[%s5 + $0x14] sm:$0xf]
    %v968 = vld [vmem:[%s5 + $0x18] sm:$0xf]
    %v969 = vld [vmem:[%s5 + $0x1c] sm:$0xf]
    %v970 = vld [vmem:[%s6] sm:$0x1]
    %v972 = vlaneseq
    %v973 = vshrl.u32 %v972, 7
    %v974 = vsub.s32 0, %v973
    %v975 = vrot.slane %v970, %v974
    %v985 = vunpack.c.l.b16 %v962
    %v986 = vunpack.c.l.b16 %v963
    %v987 = vunpack.c.l.b16 %v964
    %v988 = vunpack.c.l.b16 %v965
    %v989 = vunpack.c.l.b16 %v966
    %v990 = vunpack.c.l.b16 %v967
    %v991 = vunpack.c.l.b16 %v968
    %v992 = vunpack.c.l.b16 %v969
    %v993 = vpack.c.b16 %v986, %v985
    %v994 = vpack.c.b16 %v988, %v987
    %v995 = vpack.c.b16 %v990, %v989
    %v996 = vpack.c.b16 %v992, %v991
    %vm1001 = vcmask 523264
    %v1003 = vsel %vm1001, %v961, 0
    %1005 = vmatprep.subr.bf16.mxu0 0
    %1006 = vmatpush1.bf16.msra.mxu0 %v993
    %1007 = vmatprep.subr.bf16.mxu0 0
    %1008 = vmatpush1.bf16.msra.mxu0 %v994
    %1009 = vmatprep.subr.bf16.mxu0 0
    %1010 = vmatpush1.bf16.msra.mxu0 %v995
    %1011 = vmatprep.subr.bf16.mxu0 0
    %1012 = vmatpush1.bf16.msra.mxu0 %v996
    %1013 = vmatprep.subr.bf16.mxu0 0
    %1014 = vmatpush1.bf16.msra.mxu0 0
    %1015 = vmatprep.subr.bf16.mxu0 0
    %1016 = vmatpush1.bf16.msra.mxu0 0
    %1017 = vmatprep.subr.bf16.mxu0 0
    %1018 = vmatpush1.bf16.msra.mxu0 0
    %1019 = vmatprep.subr.bf16.mxu0 0
    %1020 = vmatpush1.bf16.msra.mxu0 0
    %1021 = vmatprep.subr.bf16.mxu0 0
    %1022 = vmatpush1.bf16.msra.mxu0 0
    %1023 = vmatprep.subr.bf16.mxu0 0
    %1024 = vmatpush1.bf16.msra.mxu0 0
    %1025 = vmatprep.subr.bf16.mxu0 0
    %1026 = vmatpush1.bf16.msra.mxu0 0
    %1027 = vmatprep.subr.bf16.mxu0 0
    %1028 = vmatpush1.bf16.msra.mxu0 0
    %1029 = vmatprep.subr.bf16.mxu0 0
    %1030 = vmatpush1.bf16.msra.mxu0 0
    %1031 = vmatprep.subr.bf16.mxu0 0
    %1032 = vmatpush1.bf16.msra.mxu0 0
    %1033 = vmatprep.subr.bf16.mxu0 0
    %1034 = vmatpush1.bf16.msra.mxu0 0
    %1035 = vmatprep.subr.bf16.mxu0 0
    %1036 = vmatpush1.bf16.msra.mxu0 0
    %1037 = vmatprep.mubr.bf16.mxu0 0
    %1038 = vmatmul.mubr.bf16.gmra.mrb[0].mxu0 %v1003
    %v1039 = vpop.f32.mrb[0].mxu0
    %v1040 = vadd.f32 %v975, %v1039
    %v1041 = vpop.f32.mrb[0].mxu0
    %v1042 = vpop.f32.mrb[0].mxu0
    %v1043 = vpop.f32.mrb[0].mxu0
    %1044 = vdwg.mxu0
    %v1045 = vmax.f32 %v1040, 0.0
    %v1046 = vpack.c.bf16 %v1045, %v1045
    %v1047 = vld [vmem:[#allocation6] sm:$0xf]
    %v1048 = vld [vmem:[#allocation6 + $0x4] sm:$0xf]
    %v1049 = vld [vmem:[#allocation6 + $0x8] sm:$0xf]
    %v1050 = vld [vmem:[#allocation6 + $0xc] sm:$0xf]
    %v1051 = vld [vmem:[#allocation6 + $0x10] sm:$0xf]
    %v1052 = vld [vmem:[#allocation6 + $0x14] sm:$0xf]
    %v1053 = vld [vmem:[#allocation6 + $0x18] sm:$0xf]
    %v1054 = vld [vmem:[#allocation6 + $0x1c] sm:$0xf]
    %v1055 = vld [vmem:[#allocation6 + $0x20] sm:$0xf]
    %v1056 = vld [vmem:[#allocation6 + $0x24] sm:$0xf]
    %v1057 = vld [vmem:[#allocation6 + $0x28] sm:$0xf]
    %v1058 = vld [vmem:[#allocation6 + $0x2c] sm:$0xf]
    %v1059 = vld [vmem:[#allocation6 + $0x30] sm:$0xf]
    %v1060 = vld [vmem:[#allocation6 + $0x34] sm:$0xf]
    %v1061 = vld [vmem:[#allocation6 + $0x38] sm:$0xf]
    %v1062 = vld [vmem:[#allocation6 + $0x3c] sm:$0xf]
    %v1063 = vld [vmem:[%s8] sm:$0x1]
    %v1065 = vlaneseq
    %v1066 = vshrl.u32 %v1065, 7
    %v1067 = vsub.s32 0, %v1066
    %v1068 = vrot.slane %v1063, %v1067
    %v1086 = vunpack.c.l.b16 %v1047
    %v1087 = vunpack.c.l.b16 %v1048
    %v1088 = vunpack.c.l.b16 %v1049
    %v1089 = vunpack.c.l.b16 %v1050
    %v1090 = vunpack.c.l.b16 %v1051
    %v1091 = vunpack.c.l.b16 %v1052
    %v1092 = vunpack.c.l.b16 %v1053
    %v1093 = vunpack.c.l.b16 %v1054
    %v1094 = vunpack.c.l.b16 %v1055
    %v1095 = vunpack.c.l.b16 %v1056
    %v1096 = vunpack.c.l.b16 %v1057
    %v1097 = vunpack.c.l.b16 %v1058
    %v1098 = vunpack.c.l.b16 %v1059
    %v1099 = vunpack.c.l.b16 %v1060
    %v1100 = vunpack.c.l.b16 %v1061
    %v1101 = vunpack.c.l.b16 %v1062
    %v1102 = vpack.c.b16 %v1087, %v1086
    %v1103 = vpack.c.b16 %v1089, %v1088
    %v1104 = vpack.c.b16 %v1091, %v1090
    %v1105 = vpack.c.b16 %v1093, %v1092
    %v1106 = vpack.c.b16 %v1095, %v1094
    %v1107 = vpack.c.b16 %v1097, %v1096
    %v1108 = vpack.c.b16 %v1099, %v1098
    %v1109 = vpack.c.b16 %v1101, %v1100
    %1118 = vmatprep.subr.bf16.mxu0 0
    %1119 = vmatpush1.bf16.msra.mxu0 %v1102
    %1120 = vmatprep.subr.bf16.mxu0 0
    %1121 = vmatpush1.bf16.msra.mxu0 %v1103
    %1122 = vmatprep.subr.bf16.mxu0 0
    %1123 = vmatpush1.bf16.msra.mxu0 %v1104
    %1124 = vmatprep.subr.bf16.mxu0 0
    %1125 = vmatpush1.bf16.msra.mxu0 %v1105
    %1126 = vmatprep.subr.bf16.mxu0 0
    %1127 = vmatpush1.bf16.msra.mxu0 %v1106
    %1128 = vmatprep.subr.bf16.mxu0 0
    %1129 = vmatpush1.bf16.msra.mxu0 %v1107
    %1130 = vmatprep.subr.bf16.mxu0 0
    %1131 = vmatpush1.bf16.msra.mxu0 %v1108
    %1132 = vmatprep.subr.bf16.mxu0 0
    %1133 = vmatpush1.bf16.msra.mxu0 %v1109
    %1134 = vmatprep.subr.bf16.mxu0 0
    %1135 = vmatpush1.bf16.msra.mxu0 0
    %1136 = vmatprep.subr.bf16.mxu0 0
    %1137 = vmatpush1.bf16.msra.mxu0 0
    %1138 = vmatprep.subr.bf16.mxu0 0
    %1139 = vmatpush1.bf16.msra.mxu0 0
    %1140 = vmatprep.subr.bf16.mxu0 0
    %1141 = vmatpush1.bf16.msra.mxu0 0
    %1142 = vmatprep.subr.bf16.mxu0 0
    %1143 = vmatpush1.bf16.msra.mxu0 0
    %1144 = vmatprep.subr.bf16.mxu0 0
    %1145 = vmatpush1.bf16.msra.mxu0 0
    %1146 = vmatprep.subr.bf16.mxu0 0
    %1147 = vmatpush1.bf16.msra.mxu0 0
    %1148 = vmatprep.subr.bf16.mxu0 0
    %1149 = vmatpush1.bf16.msra.mxu0 0
    %1150 = vmatprep.mubr.bf16.mxu0 0
    %1151 = vmatmul.mubr.bf16.gmra.mrb[0].mxu0 %v1046
    %v1152 = vpop.f32.mrb[0].mxu0
    %v1153 = vadd.f32 %v1068, %v1152
    %v1154 = vpop.f32.mrb[0].mxu0
    %v1155 = vpop.f32.mrb[0].mxu0
    %v1156 = vpop.f32.mrb[0].mxu0
    %1157 = vdwg.mxu0
    %1158 = vst [vmem:[%s9] sm:$0xff] %v1153
    // Predicated region
    $region50: #{_lambda_.1} parent=1 // pred_check
      _
    $region51: #{_lambda_.1} parent=1 // pred_check_branch
      %1160 = sbr.rel (0) target = $region53
    $region52: #{_lambda_.1} parent=1 // pred_region
      _
    $region53: #{_lambda_.1} parent=1 // pred_fallthru
      _
    // Predicated region
    $region54: #{_lambda_.1} parent=1 // pred_check
      _
    $region55: #{_lambda_.1} parent=1 // pred_check_branch
      %1162 = sbr.rel (0) target = $region57
    $region56: #{_lambda_.1} parent=1 // pred_region
      _
    $region57: #{_lambda_.1} parent=1 // pred_fallthru
      _
    %1163 = vsyncpa [#allocation3], 1
    %1164 = vsyncpa [#allocation5], 1

</llo_original>
